<compile_context>
chip_gen: v6e
topology: v6e:2x2x1
jax: 0.10.0
libtpu: 0.0.40
codegen_flags: <defaults>
</compile_context>

<pallas_src>
import functools

import jax
import jax.numpy as jnp
from jax.experimental import pallas as pl
from jax.experimental.pallas import tpu as pltpu


def _label_smoothing_kernel(x_ref, t_ref, out_ref, *, confidence, smoothing,
                            n_total):
    # x_ref: (TN, C) logits tile, t_ref: (TN, 1) int32 targets tile,
    # out_ref: (1, 1) f32 running sum (mean written at the last grid step).
    i = pl.program_id(0)
    tn, c = x_ref.shape

    @pl.when(i == 0)
    def _():
        out_ref[...] = jnp.zeros_like(out_ref)

    x = x_ref[...].astype(jnp.float32)                     # (TN, C)
    t = t_ref[...]                                         # (TN, 1) int32

    # Mask rows past the true batch size (ragged last tile): zero the padded
    # logits so they can't produce inf/nan, then zero their per-row loss.
    row = jax.lax.broadcasted_iota(jnp.int32, (tn, 1), 0) + i * tn   # (TN, 1)
    valid = row < n_total                                            # (TN, 1)
    x = jnp.where(valid, x, 0.0)

    # Numerically stable logsumexp per row.
    m = jnp.max(x, axis=-1, keepdims=True)                 # (TN, 1)
    z = x - m                                              # (TN, C)
    lse = jnp.log(jnp.sum(jnp.exp(z), axis=-1, keepdims=True))   # (TN, 1)

    # Fused weighted reduce replacing the gather + mean of logprobs:
    #   loss = confidence*nll + smoothing*smooth
    #        = (m + lse) - sum_j (confidence*onehot_j + smoothing/C) * x_j
    # (uses confidence + smoothing == 1).
    col = jax.lax.broadcasted_iota(jnp.int32, (tn, c), 1)  # (TN, C)
    w = jnp.where(col == t, confidence, 0.0) + (smoothing / c)
    wx = jnp.sum(w * x, axis=-1, keepdims=True)            # (TN, 1)

    loss = m + lse - wx                                    # (TN, 1)
    loss = jnp.where(valid, loss, 0.0)

    out_ref[...] += jnp.sum(loss)                          # accumulate batch SUM

    @pl.when(i == pl.num_programs(0) - 1)
    def _():
        out_ref[...] = out_ref[...] / n_total              # finalize: mean over N


def label_smoothing_loss(x, target, smoothing=0.1, block_rows=None):
    """x: (N, C) float logits; target: (N,) int class indices. Returns scalar f32."""
    n, c = x.shape
    confidence = 1.0 - smoothing
    t2d = target.astype(jnp.int32).reshape(n, 1)

    if block_rows is None:
        # ~2 MiB of logits per tile: big enough to approach the HBM roofline,
        # small enough that double-buffered tiles + f32 temporaries stay well
        # inside v7x's 64 MiB VMEM (v5e/v6e have plenty of headroom).
        target_bytes = 2 * 1024 * 1024
        rows = max(8, (target_bytes // max(1, c * x.dtype.itemsize)) // 8 * 8)
        block_rows = int(rows)
    # Block second-to-last dim must be a multiple of 8 or the full extent.
    tn = n if n <= block_rows else block_rows
    num_tiles = pl.cdiv(n, tn)

    kernel = functools.partial(
        _label_smoothing_kernel,
        confidence=float(confidence),
        smoothing=float(smoothing),
        n_total=n,
    )

    # VMEM budget: double-buffered (x, target) tiles + f32 temporaries + headroom.
    tile_bytes = tn * c * x.dtype.itemsize + tn * 4
    vmem_limit = int(min(64 * 1024 * 1024, max(16 * 1024 * 1024, 8 * tile_bytes)))

    out = pl.pallas_call(
        kernel,
        out_shape=jax.ShapeDtypeStruct((1, 1), jnp.float32),
        grid_spec=pl.GridSpec(
            grid=(num_tiles,),
            in_specs=[
                pl.BlockSpec((tn, c), lambda i: (i, 0)),
                pl.BlockSpec((tn, 1), lambda i: (i, 0)),
            ],
            # Same (0, 0) block every step -> resident accumulator.
            out_specs=pl.BlockSpec((1, 1), lambda i: (0, 0)),
        ),
        compiler_params=pltpu.CompilerParams(
            # Accumulator output => grid axis must be "arbitrary".
            # TODO(synk): v7x 2-TC variant: emit per-tile partial sums with a
            # "parallel" axis and reduce in the wrapper.
            dimension_semantics=("arbitrary",),
            vmem_limit_bytes=vmem_limit,
        ),
    )(x, t2d)
    return out[0, 0]


if __name__ == "__main__":
    key = jax.random.PRNGKey(0)
    kx, kt = jax.random.split(key)

    # Small deterministic example. N=20 with block_rows=8 exercises the
    # multi-tile accumulator AND the ragged-last-tile row mask.
    N, C = 20, 32
    x = jax.random.normal(kx, (N, C), dtype=jnp.float32)
    target = jax.random.randint(kt, (N,), 0, C, dtype=jnp.int32)
    smoothing = 0.1

    loss = label_smoothing_loss(x, target, smoothing=smoothing, block_rows=8)
    loss = jax.block_until_ready(loss)

    # Pure-JAX reference of the same semantics.
    logprobs = jax.nn.log_softmax(x, axis=-1)
    nll = -jnp.take_along_axis(logprobs, target[:, None], axis=-1)[:, 0]
    smooth = -jnp.mean(logprobs, axis=-1)
    ref = jnp.mean((1.0 - smoothing) * nll + smoothing * smooth)

    assert jnp.allclose(loss, ref, rtol=1e-5, atol=1e-5), (loss, ref)
    print("KERNEL_OK")
</pallas_src>

<mosaic_0001>
module attributes {stable_mosaic.version = 11 : i64} {
  func.func @_label_smoothing_kernel(%arg0: i32, %arg1: memref<8x32xf32, #tpu.memory_space<vmem>>, %arg2: memref<8x1xi32, #tpu.memory_space<vmem>>, %arg3: memref<1x1xf32, #tpu.memory_space<vmem>>) attributes {dimension_semantics = [#tpu.dimension_semantics<arbitrary>], iteration_bounds = array<i64: 3>, scalar_prefetch = 0 : i64, scratch_operands = 0 : i64, tpu.core_type = #tpu.core_type<tc>, window_params = [{transform_indices = @transform_0, window_bounds = array<i64: 8, 32>}, {transform_indices = @transform_1, window_bounds = array<i64: 8, 1>}, {pipeline_mode = #tpu.pipeline_mode<synchronous>, transform_indices = @transform_2, window_bounds = array<i64: 1, 1>}]} {
    %c0_i32 = arith.constant 0 : i32
    %0 = arith.cmpi eq, %arg0, %c0_i32 : i32
    %1 = arith.extui %0 : i1 to i32
    %c0_i32_0 = arith.constant 0 : i32
    %2 = arith.cmpi ne, %1, %c0_i32_0 : i32
    scf.if %2 {
      %cst_17 = arith.constant 0.000000e+00 : f32
      %49 = vector.broadcast %cst_17 : f32 to vector<1x1xf32>
      %c0_18 = arith.constant 0 : index
      %c0_19 = arith.constant 0 : index
      %50 = vector.load %arg3[%c0_18, %c0_19] : memref<1x1xf32, #tpu.memory_space<vmem>>, vector<1x1xf32>
      tpu.vector_store %arg3[%c0_18, %c0_19], %49 {strides = array<i32>} : memref<1x1xf32, #tpu.memory_space<vmem>>, vector<1x1xf32>,
    } else {
    }
    %c0 = arith.constant 0 : index
    %c0_1 = arith.constant 0 : index
    %3 = vector.load %arg1[%c0, %c0_1] : memref<8x32xf32, #tpu.memory_space<vmem>>, vector<8x32xf32>
    %c0_2 = arith.constant 0 : index
    %c0_3 = arith.constant 0 : index
    %4 = vector.load %arg2[%c0_2, %c0_3] : memref<8x1xi32, #tpu.memory_space<vmem>>, vector<8x1xi32>
    %5 = tpu.iota {dimensions = array<i32: 0>} : vector<8x1xi32>
    %c8_i32 = arith.constant 8 : i32
    %6 = arith.muli %arg0, %c8_i32 : i32
    %7 = vector.broadcast %6 : i32 to vector<8x1xi32>
    %8 = arith.addi %5, %7 : vector<8x1xi32>
    %c20_i32 = arith.constant 20 : i32
    %9 = vector.broadcast %c20_i32 : i32 to vector<8x1xi32>
    %10 = arith.cmpi slt, %8, %9 : vector<8x1xi32>
    %cst = arith.constant 0.000000e+00 : f32
    %11 = vector.shape_cast %10 : vector<8x1xi1> to vector<8x1xi1>
    %12 = vector.broadcast %11 : vector<8x1xi1> to vector<8x32xi1>
    %13 = vector.broadcast %cst : f32 to vector<8x32xf32>
    %14 = arith.select %12, %3, %13 : vector<8x32xi1>, vector<8x32xf32>
    %cst_4 = arith.constant dense<0xFF800000> : vector<8xf32>
    %15 = vector.multi_reduction <maximumf>, %14, %cst_4 [1] : vector<8x32xf32> to vector<8xf32>
    %16 = vector.shape_cast %15 : vector<8xf32> to vector<8x1xf32>
    %17 = vector.broadcast %16 : vector<8x1xf32> to vector<8x32xf32>
    %18 = arith.subf %14, %17 : vector<8x32xf32>
    %19 = math.exp %18 : vector<8x32xf32>
    %cst_5 = arith.constant dense<0.000000e+00> : vector<8xf32>
    %20 = vector.multi_reduction <add>, %19, %cst_5 [1] : vector<8x32xf32> to vector<8xf32>
    %21 = vector.shape_cast %20 : vector<8xf32> to vector<8x1xf32>
    %22 = math.log %21 : vector<8x1xf32>
    %23 = tpu.iota {dimensions = array<i32: 1>} : vector<8x32xi32>
    %24 = vector.broadcast %4 : vector<8x1xi32> to vector<8x32xi32>
    %25 = arith.cmpi eq, %23, %24 : vector<8x32xi32>
    %cst_6 = arith.constant 0.899999976 : f32
    %cst_7 = arith.constant 0.000000e+00 : f32
    %26 = vector.broadcast %cst_6 : f32 to vector<8x32xf32>
    %27 = vector.broadcast %cst_7 : f32 to vector<8x32xf32>
    %28 = arith.select %25, %26, %27 : vector<8x32xi1>, vector<8x32xf32>
    %cst_8 = arith.constant 3.125000e-03 : f32
    %29 = vector.broadcast %cst_8 : f32 to vector<8x32xf32>
    %30 = arith.addf %28, %29 : vector<8x32xf32>
    %31 = arith.mulf %30, %14 : vector<8x32xf32>
    %cst_9 = arith.constant dense<0.000000e+00> : vector<8xf32>
    %32 = vector.multi_reduction <add>, %31, %cst_9 [1] : vector<8x32xf32> to vector<8xf32>
    %33 = vector.shape_cast %32 : vector<8xf32> to vector<8x1xf32>
    %34 = arith.addf %16, %22 : vector<8x1xf32>
    %35 = arith.subf %34, %33 : vector<8x1xf32>
    %cst_10 = arith.constant 0.000000e+00 : f32
    %36 = vector.broadcast %cst_10 : f32 to vector<8x1xf32>
    %37 = arith.select %10, %35, %36 : vector<8x1xi1>, vector<8x1xf32>
    %c0_11 = arith.constant 0 : index
    %c0_12 = arith.constant 0 : index
    %38 = vector.load %arg3[%c0_11, %c0_12] : memref<1x1xf32, #tpu.memory_space<vmem>>, vector<1x1xf32>
    %39 = vector.shape_cast %37 : vector<8x1xf32> to vector<1x8x1xf32>
    %cst_13 = arith.constant dense<0.000000e+00> : vector<1xf32>
    %40 = vector.multi_reduction <add>, %39, %cst_13 [1, 2] : vector<1x8x1xf32> to vector<1xf32>
    %41 = vector.shape_cast %40 : vector<1xf32> to vector<1x1x1xf32>
    %42 = vector.extract %41[0, 0, 0] : f32 from vector<1x1x1xf32>
    %43 = vector.broadcast %42 : f32 to vector<1x1xf32>
    %44 = arith.addf %38, %43 : vector<1x1xf32>
    %c0_14 = arith.constant 0 : index
    %c0_15 = arith.constant 0 : index
    %45 = vector.load %arg3[%c0_14, %c0_15] : memref<1x1xf32, #tpu.memory_space<vmem>>, vector<1x1xf32>
    tpu.vector_store %arg3[%c0_14, %c0_15], %44 {strides = array<i32>} : memref<1x1xf32, #tpu.memory_space<vmem>>, vector<1x1xf32>,
    %c2_i32 = arith.constant 2 : i32
    %46 = arith.cmpi eq, %arg0, %c2_i32 : i32
    %47 = arith.extui %46 : i1 to i32
    %c0_i32_16 = arith.constant 0 : i32
    %48 = arith.cmpi ne, %47, %c0_i32_16 : i32
    scf.if %48 {
      %c0_17 = arith.constant 0 : index
      %c0_18 = arith.constant 0 : index
      %49 = vector.load %arg3[%c0_17, %c0_18] : memref<1x1xf32, #tpu.memory_space<vmem>>, vector<1x1xf32>
      %cst_19 = arith.constant 2.000000e+01 : f32
      %50 = vector.broadcast %cst_19 : f32 to vector<1x1xf32>
      %51 = arith.divf %49, %50 : vector<1x1xf32>
      %c0_20 = arith.constant 0 : index
      %c0_21 = arith.constant 0 : index
      %52 = vector.load %arg3[%c0_20, %c0_21] : memref<1x1xf32, #tpu.memory_space<vmem>>, vector<1x1xf32>
      tpu.vector_store %arg3[%c0_20, %c0_21], %51 {strides = array<i32>} : memref<1x1xf32, #tpu.memory_space<vmem>>, vector<1x1xf32>,
    } else {
    }
    return
  }
  func.func @transform_0(%arg0: i32) -> (i32, i32) {
    %c0_i32 = arith.constant 0 : i32
    %c0_i32_0 = arith.constant 0 : i32
    return %arg0, %c0_i32 : i32, i32
  }
  func.func @transform_1(%arg0: i32) -> (i32, i32) {
    %c0_i32 = arith.constant 0 : i32
    %c0_i32_0 = arith.constant 0 : i32
    return %arg0, %c0_i32 : i32, i32
  }
  func.func @transform_2(%arg0: i32) -> (i32, i32) {
    %c0_i32 = arith.constant 0 : i32
    %c0_i32_0 = arith.constant 0 : i32
    %c0_i32_1 = arith.constant 0 : i32
    return %c0_i32, %c0_i32_0 : i32, i32
  }
}

</mosaic_0001>

<llo_original>
// kernel: tpu_custom_call.1
$region0: #{tpu_custom_call.1}
  #allocation0 [shape = 'u32[]', space=smem, size = 0x4, offset = 0x4, fixed_abs, tag = 'smem constant byte address 0x4 - core index']
  #allocation1 [shape = 'u32[144,128]{1,0:T(1,128)}', space=vmem, size = 0x12000, scoped, tag = 'internal scratch']
  %s0 = inlined_call_operand.vmem [shape: f32[20,32], index: 0, kind: input, shape index: {}]
  %s1 = inlined_call_operand.vmem [shape: s32[20,1], index: 1, kind: input, shape index: {}]
  %s2 = inlined_call_operand.hbm [shape: f32[1,1], index: 2, kind: output, shape index: {}]
  %s3 = sld [smem:[#allocation0]]
  $region49: #{tpu_custom_call.1} parent=0
    _
  %s5 = ssub.s32 1, %s3
  %s6 = scalar_select 0, %s5, %s3
  $region1: #{tpu_custom_call.1} parent=0
    #allocation2 [shape = 'u8[512]{0}', space=vmem, size = 0x400, scoped, tag = 'output window, operand 0, single buffered']
    #allocation3 [shape = 's32[2]{0}', space=sflag, size = 0x8, scoped, tag = 'scoped memory for tpu_custom_call.1']
    %7 = vsyncpa [#allocation3], 0
    loop: start=0, step=1, limit=5
    $region2: #{tpu_custom_call.1} parent=1 // loop_pre_header
      _
    $region3: #{tpu_custom_call.1} parent=1 // loop_header
      %s9 = sphi 0, %s13
      %p10 = scmp.ge.s32.totalorder %s9, 5
      %s19 = sphi 0, %s21
      %s22 = sphi 0, %s19
      %s23 = sphi 0, %s22
      %s39 = sphi 0, %s23
      %s45 = sphi 0, %s47
      %s48 = sphi 0, %s45
      %s49 = sphi 0, %s48
      %s65 = sphi 0, %s49
      %s69 = sphi 0, %s69
      %s71 = sphi 0, %s69
      %s72 = sphi 0, %s71
      %s86 = sphi 0, %s72
    $region4: #{tpu_custom_call.1} parent=1 // loop_header_branch
      %12 = sbr.rel (%p10) target = $region8
    $region5: #{tpu_custom_call.1} parent=1 // loop_body
      %s14 = ssub.s32 %s9, 1
      %s15 = ssub.s32 %s9, 2
      %s16 = sadd.s32 %s9, 1
      %s17 = ssub.s32 %s9, %s16
      %p18 = scmp.eq.s32.totalorder %s17, 0
      %s20 = sadd.s32 %s19, 1
      %s21 = scalar_select %p18, %s19, %s20
      %p24 = pneg %p18
      %p25 = scmp.eq.s32.totalorder %s9, 2
      %p26 = por %p24, %p25
      %p27 = scmp.ne.s32.totalorder %s19, %s22
      %p28 = scmp.eq.s32.totalorder %s9, 0
      %p29 = por %p27, %p28
      %p30 = scmp.ne.s32.totalorder %s19, %s22
      %p31 = scmp.eq.s32.totalorder %s14, 2
      %p32 = por %p30, %p31
      %p33 = scmp.ne.s32.totalorder %s22, %s23
      %p34 = scmp.eq.s32.totalorder %s14, 0
      %p35 = por %p33, %p34
      %p36 = scmp.ne.s32.totalorder %s22, %s23
      %p37 = scmp.eq.s32.totalorder %s15, 2
      %p38 = por %p36, %p37
      %p40 = scmp.ne.s32.totalorder %s23, %s39
      %p41 = scmp.eq.s32.totalorder %s15, 0
      %p42 = por %p40, %p41
      %s43 = ssub.s32 %s9, %s16
      %p44 = scmp.eq.s32.totalorder %s43, 0
      %s46 = sadd.s32 %s45, 1
      %s47 = scalar_select %p44, %s45, %s46
      %p50 = pneg %p44
      %p51 = scmp.eq.s32.totalorder %s9, 2
      %p52 = por %p50, %p51
      %p53 = scmp.ne.s32.totalorder %s45, %s48
      %p54 = scmp.eq.s32.totalorder %s9, 0
      %p55 = por %p53, %p54
      %p56 = scmp.ne.s32.totalorder %s45, %s48
      %p57 = scmp.eq.s32.totalorder %s14, 2
      %p58 = por %p56, %p57
      %p59 = scmp.ne.s32.totalorder %s48, %s49
      %p60 = scmp.eq.s32.totalorder %s14, 0
      %p61 = por %p59, %p60
      %p62 = scmp.ne.s32.totalorder %s48, %s49
      %p63 = scmp.eq.s32.totalorder %s15, 2
      %p64 = por %p62, %p63
      %p66 = scmp.ne.s32.totalorder %s49, %s65
      %p67 = scmp.eq.s32.totalorder %s15, 0
      %p68 = por %p66, %p67
      %s70 = sadd.s32 %s69, 1
      %p73 = scmp.eq.s32.totalorder %s9, 2
      %p74 = scmp.ne.s32.totalorder %s69, %s71
      %p75 = scmp.eq.s32.totalorder %s9, 0
      %p76 = por %p74, %p75
      %p77 = scmp.ne.s32.totalorder %s69, %s71
      %p78 = scmp.eq.s32.totalorder %s14, 2
      %p79 = por %p77, %p78
      %p80 = scmp.ne.s32.totalorder %s71, %s72
      %p81 = scmp.eq.s32.totalorder %s14, 0
      %p82 = por %p80, %p81
      %p83 = scmp.ne.s32.totalorder %s71, %s72
      %p84 = scmp.eq.s32.totalorder %s15, 2
      %p85 = por %p83, %p84
      %p87 = scmp.ne.s32.totalorder %s72, %s86
      %p88 = scmp.eq.s32.totalorder %s15, 0
      %p89 = por %p87, %p88
      %p90 = scmp.le.s32.totalorder 1, %s9
      %p91 = scmp.lt.s32.totalorder %s9, 4
      %p92 = pnand %p90, %p91
      %p93 = pneg %p92
      // Predicated region
      $region9: #{tpu_custom_call.1} parent=5 // pred_check
        _
      $region10: #{tpu_custom_call.1} parent=5 // pred_check_branch
        %95 = sbr.rel (%p92) target = $region12
      $region11: #{tpu_custom_call.1} parent=5 // pred_region
        %s96 = ssub.s32 %s9, 1
      $region12: #{tpu_custom_call.1} parent=5 // pred_fallthru
        _
      %p97 = scmp.lt.s32.totalorder %s9, 3
      // Predicated region
      $region13: #{tpu_custom_call.1} parent=5 // pred_check
        %p98 = pneg %p97
      $region14: #{tpu_custom_call.1} parent=5 // pred_check_branch
        %100 = sbr.rel (%p98) target = $region16
      $region15: #{tpu_custom_call.1} parent=5 // pred_region
        // Predicated region
        $region17: #{tpu_custom_call.1} parent=15 // pred_check
          %p101 = pneg %p29
        $region18: #{tpu_custom_call.1} parent=15 // pred_check_branch
          %103 = sbr.rel (%p101) target = $region20
        $region19: #{tpu_custom_call.1} parent=15 // pred_region
          %p104 = scmp.lt.s32.totalorder %s9, 2
          %s105 = scalar_select %p104, %s9, 2
          %s106 = smul.addr %s105, 8
          %s107 = scalar_lea.vmem %s0, %s106
        $region20: #{tpu_custom_call.1} parent=15 // pred_fallthru
          _
        // Predicated region
        $region21: #{tpu_custom_call.1} parent=15 // pred_check
          %p108 = pneg %p55
        $region22: #{tpu_custom_call.1} parent=15 // pred_check_branch
          %110 = sbr.rel (%p108) target = $region24
        $region23: #{tpu_custom_call.1} parent=15 // pred_region
          %p111 = scmp.lt.s32.totalorder %s9, 2
          %s112 = scalar_select %p111, %s9, 2
          %s113 = smul.addr %s112, 8
          %s114 = scalar_lea.vmem %s1, %s113
        $region24: #{tpu_custom_call.1} parent=15 // pred_fallthru
          _
      $region16: #{tpu_custom_call.1} parent=5 // pred_fallthru
        _
      %p115 = scmp.le.s32.totalorder 1, %s9
      %p116 = scmp.lt.s32.totalorder %s9, 4
      %p117 = pnand %p115, %p116
      %p118 = pneg %p117
      // Predicated region
      $region25: #{tpu_custom_call.1} parent=5 // pred_check
        _
      $region26: #{tpu_custom_call.1} parent=5 // pred_check_branch
        %120 = sbr.rel (%p117) target = $region28
      $region27: #{tpu_custom_call.1} parent=5 // pred_region
        %s121 = ssub.s32 %s9, 1
        %p122 = scmp.lt.s32.totalorder %s14, 2
        %s123 = scalar_select %p122, %s14, 2
        %s124 = smul.addr %s123, 8
        %s125 = scalar_lea.vmem %s0, %s124
        %p126 = pneg %p35
        %p127 = pneg %p32
        %p128 = scmp.lt.s32.totalorder %s14, 2
        %s129 = scalar_select %p128, %s14, 2
        %s130 = smul.addr %s129, 8
        %s131 = scalar_lea.vmem %s1, %s130
        %p132 = pneg %p61
        %p133 = pneg %p58
        %p134 = pneg %p82
        %p135 = pneg %p79
        %p136 = scmp.lt.s32.totalorder %s14, 2
        %s137 = scalar_select %p136, %s14, 2
        %s138 = smul.addr %s137, 8
        %s139 = scalar_lea.vmem %s0, %s138
        %p140 = scmp.lt.s32.totalorder %s14, 2
        %s141 = scalar_select %p140, %s14, 2
        %s142 = smul.addr %s141, 8
        %s143 = scalar_lea.vmem %s1, %s142
        %p144 = scmp.eq.s32.totalorder %s14, 0
        // Predicated region
        $region29: #{tpu_custom_call.1} parent=27 // pred_check
          %p145 = pneg %p144
        $region30: #{tpu_custom_call.1} parent=27 // pred_check_branch
          %147 = sbr.rel (%p145) target = $region32
        $region31: #{tpu_custom_call.1} parent=27 // pred_region
          %vm148 = vcmask 0
          %149 = vst.msk [vmem:[#allocation2] sm:$0x1] %vm148, 0.0
        $region32: #{tpu_custom_call.1} parent=27 // pred_fallthru
          _
        %v150 = vld [vmem:[%s139] sm:$0xff]
        %v151 = vld [vmem:[%s143] sm:$0xff]
        %v152 = vlaneseq
        %v153 = vshrl.u32 %v152, 7
        %s154 = smul.u32 %s14, 8
        %v155 = vstv %s154
        %v156 = vadd.s32 %v153, %v155
        %vm157 = vcmp.lt.s32.totalorder %v156, 20
        %v158 = vsel %vm157, 1, 0
        %vm159 = vcmp.eq.s32.totalorder %v158, 1
        %v160 = vsel %vm159, %v150, 0.0
        %vm161 = vcmask 261120
        %v162 = vsel %vm161, %v160, -inf
        %163 = vmax.xlane.f32.xlu0 %v162
        %v164 = vpop.xlane.xlu0 %163
        %v165 = vsub.f32 %v160, %v164
        %v166 = vmul.f32 %v165, 1.442695
        %v167 = vpow.pop %v166
        %v168 = vsel %vm161, %v167, 0.0
        %169 = vadd.xlane.f32.xlu0 %v168
        %v170 = vpop.xlane.xlu0 %169
        %v171 = vlog2.pop %v170
        %v172 = vmul.f32 %v171, 0.6931472
        %v173 = vlaneseq
        %v174 = vand.u32 %v173, 127
        %175 = vset.pattern.permute.xlu0 0
        %176 = vperm.xlu0 %175, %v151
        %v177 = vpop.permute.xlu0 %176
        %vm178 = vcmp.eq.s32.totalorder %v174, %v177
        %v179 = vsel %vm178, 0.9, 0.0
        %v180 = vadd.f32 %v179, 0.003125
        %v181 = vmul.f32 %v180, %v160
        %v182 = vsel %vm161, %v181, 0.0
        %183 = vadd.xlane.f32.xlu0 %v182
        %v184 = vpop.xlane.xlu0 %183
        %v185 = vadd.f32 %v164, %v172
        %v186 = vsub.f32 %v185, %v184
        %v187 = vsel %vm157, %v186, 0.0
        %v188 = vld [vmem:[#allocation2] sm:$0x1]
        %vm189 = vcmask 7168
        %v190 = vsel %vm189, %v187, 0.0
        %191 = vadd.xlane.f32.xlu0 %v190
        %v192 = vpop.xlane.xlu0 %191
        %v193 = vrot.slane %v192, 4
        %v194 = vadd.f32 %v192, %v193
        %v195 = vrot.slane %v194, 2
        %v196 = vadd.f32 %v194, %v195
        %v197 = vrot.slane %v196, 1
        %v198 = vadd.f32 %v196, %v197
        %s199 = vtos %v198
        %v200 = vstv %s199
        %v201 = vadd.f32 %v188, %v200
        %vm202 = vcmask 0
        %203 = vst.msk [vmem:[#allocation2] sm:$0x1] %vm202, %v201
        %p204 = scmp.eq.s32.totalorder %s14, 2
        // Predicated region
        $region33: #{tpu_custom_call.1} parent=27 // pred_check
          %p205 = pneg %p204
        $region34: #{tpu_custom_call.1} parent=27 // pred_check_branch
          %207 = sbr.rel (%p205) target = $region36
        $region35: #{tpu_custom_call.1} parent=27 // pred_region
          %v208 = vld [vmem:[#allocation2] sm:$0x1]
          %v209 = vrcp.pop 20.0
          %v210 = vmul.f32 %v208, %v209
          %211 = vst.msk [vmem:[#allocation2] sm:$0x1] %vm202, %v210
        $region36: #{tpu_custom_call.1} parent=27 // pred_fallthru
          _
        // Predicated region
        $region37: #{tpu_custom_call.1} parent=27 // pred_check
          %p212 = pneg %p79
        $region38: #{tpu_custom_call.1} parent=27 // pred_check_branch
          %214 = sbr.rel (%p212) target = $region40
        $region39: #{tpu_custom_call.1} parent=27 // pred_region
          %s216 = ssub.s32 16, 16
          %217 = vsyncadd [#allocation3], %s216
          %s219 = sshll.u32 [#allocation2], 4
          %s220 = int_to_ptr.vmem [resolvable:$true] %s219
          %222 = dma.vmem_to_hbm [thread:$0]  %s220, 16, %s2, [#allocation3]
        $region40: #{tpu_custom_call.1} parent=27 // pred_fallthru
          _
        // Predicated region
        $region41: #{tpu_custom_call.1} parent=27 // pred_check
          %p223 = pneg %p79
        $region42: #{tpu_custom_call.1} parent=27 // pred_check_branch
          %225 = sbr.rel (%p223) target = $region44
        $region43: #{tpu_custom_call.1} parent=27 // pred_region
          %226 = dma.done [#allocation3], 16
        $region44: #{tpu_custom_call.1} parent=27 // pred_fallthru
          _
      $region28: #{tpu_custom_call.1} parent=5 // pred_fallthru
        _
      %p227 = scmp.le.s32.totalorder 2, %s9
      // Predicated region
      $region45: #{tpu_custom_call.1} parent=5 // pred_check
        %p228 = pneg %p227
      $region46: #{tpu_custom_call.1} parent=5 // pred_check_branch
        %230 = sbr.rel (%p228) target = $region48
      $region47: #{tpu_custom_call.1} parent=5 // pred_region
        %s231 = ssub.s32 %s9, 2
      $region48: #{tpu_custom_call.1} parent=5 // pred_fallthru
        _
    $region6: #{tpu_custom_call.1} parent=1 // loop_footer
      %s13 = sadd.s32 1, %s9
    $region7: #{tpu_custom_call.1} parent=1 // loop_footer_branch
      %8 = sbr.rel target = $region3
    $region8: #{tpu_custom_call.1} parent=1 // loop_exit
      _
    %232 = vsyncpa [#allocation3], 1
    %s233 = scalar_lea.sflag [#allocation3], 1
    %234 = vsyncpa %s233, 1

</llo_original>
